<compile_context>
chip_gen: v6e
topology: v6e:2x2x1
jax: 0.10.0
libtpu: 0.0.40
codegen_flags: <defaults>
</compile_context>

<pallas_src>
import jax
import jax.numpy as jnp
import numpy as np
from jax.experimental import pallas as pl
from jax.experimental.pallas import tpu as pltpu


def _pair_add_kernel(q_ref, p_ref, out_ref):
    # One grid step == one (batch, i-tile, j-tile) output block of shape
    # (1, Dout, TI, TJ) in the final NCHW layout.
    q = q_ref[0]                                   # (Dout, TI)  rows i
    p = p_ref[0]                                   # (Dout, TJ)  rows j
    # out[d, ti, tj] = Q[d, ti] + P[d, tj]: one VPU broadcast-add feeding
    # lane-dense, unmasked stores.
    out_ref[0] = (q[:, :, None] + p[:, None, :]).astype(out_ref.dtype)


def _pick_tile(L, cap, align=128):
    """Full extent when it fits, else the largest `align`-aligned tile <= cap."""
    if L <= cap:
        return L
    return max(align, (cap // align) * align)


def _compute_qp(x, params):
    """Hoisted MLP + factored ff projection (plain XLA). Returns Q, P as (B, Dout, L)."""
    w1, b1, w2, b2, wff, bff = params
    H = w1.shape[1]
    Dout = wff.shape[1]
    # Fused MLP: one (B, L, Din) @ (Din, 2H) matmul + LeakyReLU(0.1).
    w12 = jnp.concatenate([w1, w2], axis=1)                     # (Din, 2H)
    b12 = jnp.concatenate([b1, b2], axis=1)                     # (1, 2H)
    h = jnp.dot(x, w12, preferred_element_type=jnp.float32) + b12
    h = jnp.where(h > 0, h, 0.1 * h)                            # [h1 | h2]
    # Factored ff:  Q = 0.5*h1@Wb - h2@Wa ;  P = h1@Wa + 0.5*h2@Wb + bff
    wa, wb = wff[:H], wff[H:]
    wq = jnp.concatenate([0.5 * wb, -wa], axis=0)               # (2H, Dout)
    wp = jnp.concatenate([wa, 0.5 * wb], axis=0)                # (2H, Dout)
    wqp = jnp.concatenate([wq, wp], axis=1)                     # (2H, 2*Dout)
    qp = jnp.dot(h, wqp, preferred_element_type=jnp.float32)    # (B, L, 2*Dout)
    q = qp[..., :Dout]
    p = qp[..., Dout:] + bff
    # Pre-transpose so the kernel reads lane-dense (1, Dout, T) blocks.
    return jnp.transpose(q, (0, 2, 1)), jnp.transpose(p, (0, 2, 1))


def square_nn_forward(x, params, *, tile_i=256, tile_j=512, out_dtype=None):
    """x: (B, L, in_dim) float32.  Returns (B, out_dim, L, L) (NCHW, like torch)."""
    B, L, _ = x.shape
    wff = params[4]
    Dout = wff.shape[1]
    out_dtype = np.dtype(out_dtype) if out_dtype is not None else np.dtype(x.dtype)

    # Stage 1 (hoisted, plain XLA): per-row MLP + factored ff projection.
    qt, pt = _compute_qp(x, params)                   # each (B, Dout, L), f32

    # Stage 2 (Pallas): pairwise broadcast-add written straight to NCHW.
    TI = _pick_tile(L, tile_i)                        # sublane dim of out block
    TJ = _pick_tile(L, tile_j)                        # lane    dim of out block
    # v7x has 2 TensorCores; never let the parallel grid collapse to one step.
    if B * pl.cdiv(L, TI) * pl.cdiv(L, TJ) < 2 and L >= 256:
        TJ = max(128, ((L // 2) // 128) * 128)
    grid = (B, pl.cdiv(L, TI), pl.cdiv(L, TJ))

    in_itemsize = np.dtype(qt.dtype).itemsize
    out_itemsize = out_dtype.itemsize
    block_bytes = (Dout * TI * TJ * out_itemsize          # output block
                   + Dout * (TI + TJ) * in_itemsize)      # Q/P blocks
    # Double-buffered blocks + headroom, kept under v7x's 64 MiB physical VMEM.
    vmem_limit = int(min(max(2 * block_bytes + (4 << 20), 16 << 20), 48 << 20))

    cost = pl.CostEstimate(
        flops=B * Dout * L * L,                            # one add per output
        transcendentals=0,
        bytes_accessed=(B * Dout * L * L * out_itemsize
                        + B * Dout * L * (grid[1] + grid[2]) * in_itemsize))

    return pl.pallas_call(
        _pair_add_kernel,
        out_shape=jax.ShapeDtypeStruct((B, Dout, L, L), out_dtype),
        grid_spec=pltpu.PrefetchScalarGridSpec(
            num_scalar_prefetch=0,
            grid=grid,
            in_specs=[
                pl.BlockSpec((1, Dout, TI), lambda b, i, j: (b, 0, i)),  # Q rows i
                pl.BlockSpec((1, Dout, TJ), lambda b, i, j: (b, 0, j)),  # P rows j
            ],
            out_specs=pl.BlockSpec((1, Dout, TI, TJ),
                                   lambda b, i, j: (b, 0, i, j)),
        ),
        compiler_params=pltpu.CompilerParams(
            dimension_semantics=("parallel", "parallel", "parallel"),
            vmem_limit_bytes=vmem_limit),
        cost_estimate=cost,
    )(qt, pt)


def _reference(x, params):
    """Pure-JAX reference replicating the PyTorch forward (un-factored)."""
    w1, b1, w2, b2, wff, bff = params
    h1 = x @ w1 + b1
    h1 = jnp.where(h1 > 0, h1, 0.1 * h1)
    h2 = x @ w2 + b2
    h2 = jnp.where(h2 > 0, h2, 0.1 * h2)
    f_ij = h1[:, None, :, :] - h2[:, :, None, :]
    f_pj = (h2[:, None, :, :] + h1[:, :, None, :]) * 0.5
    feat = jnp.concatenate([f_ij, f_pj], axis=-1)
    out = feat @ wff + bff
    return jnp.transpose(out, (0, 3, 1, 2))


def _make_params(key, Din, H, Dout):
    k1, k2, k3, k4, k5, k6 = jax.random.split(key, 6)
    w1 = jax.random.normal(k1, (Din, H), dtype=jnp.float32) * 0.1
    b1 = jax.random.normal(k2, (1, H), dtype=jnp.float32) * 0.1
    w2 = jax.random.normal(k3, (Din, H), dtype=jnp.float32) * 0.1
    b2 = jax.random.normal(k4, (1, H), dtype=jnp.float32) * 0.1
    wff = jax.random.normal(k5, (2 * H, Dout), dtype=jnp.float32) * 0.1
    bff = jax.random.normal(k6, (1, Dout), dtype=jnp.float32) * 0.1
    return (w1, b1, w2, b2, wff, bff)


if __name__ == "__main__":
    key = jax.random.PRNGKey(0)
    k_small, k_big = jax.random.split(key)

    # --- Test 1: small shapes, single full-extent tile per batch element. ---
    B, L, Din, H, Dout = 2, 8, 16, 32, 4
    kx, kp = jax.random.split(k_small)
    x = jax.random.normal(kx, (B, L, Din), dtype=jnp.float32)
    params = _make_params(kp, Din, H, Dout)

    out = jax.block_until_ready(square_nn_forward(x, params))
    ref = _reference(x, params)
    np.testing.assert_allclose(np.asarray(out), np.asarray(ref),
                               rtol=1e-4, atol=1e-4)
    assert out.shape == (B, Dout, L, L)

    # --- Test 2: exercises the 128-aligned (i, j) tiling, f32 output. ---
    B2, L2, Din2, H2, Dout2 = 1, 256, 32, 32, 4
    kx2, kp2 = jax.random.split(k_big)
    x2 = jax.random.normal(kx2, (B2, L2, Din2), dtype=jnp.float32)
    params2 = _make_params(kp2, Din2, H2, Dout2)

    out2 = jax.block_until_ready(
        square_nn_forward(x2, params2, tile_i=128, tile_j=128))  # grid (1, 2, 2)
    ref2 = _reference(x2, params2)
    np.testing.assert_allclose(np.asarray(out2), np.asarray(ref2),
                               rtol=1e-4, atol=1e-4)
    assert out2.shape == (B2, Dout2, L2, L2)

    # --- Test 3: default tiles + forced j-split (v7x 2-TC path), bf16 store. ---
    out3 = jax.block_until_ready(
        square_nn_forward(x2, params2, out_dtype=jnp.bfloat16))  # grid (1, 1, 2)
    np.testing.assert_allclose(np.asarray(out3.astype(jnp.float32)),
                               np.asarray(ref2), rtol=3e-2, atol=3e-2)
    assert out3.dtype == jnp.bfloat16

    print("KERNEL_OK")
</pallas_src>

<mosaic_0001>
module attributes {stable_mosaic.version = 11 : i64} {
  func.func @_pair_add_kernel(%arg0: i32, %arg1: i32, %arg2: i32, %arg3: memref<1x4x8xf32, #tpu.memory_space<vmem>>, %arg4: memref<1x4x8xf32, #tpu.memory_space<vmem>>, %arg5: memref<1x4x8x8xf32, #tpu.memory_space<vmem>>) attributes {dimension_semantics = [#tpu.dimension_semantics<parallel>, #tpu.dimension_semantics<parallel>, #tpu.dimension_semantics<parallel>], iteration_bounds = array<i64: 2, 1, 1>, scalar_prefetch = 0 : i64, scratch_operands = 0 : i64, tpu.core_type = #tpu.core_type<tc>, window_params = [{transform_indices = @transform_0, window_bounds = array<i64: 1, 4, 8>}, {transform_indices = @transform_1, window_bounds = array<i64: 1, 4, 8>}, {transform_indices = @transform_2, window_bounds = array<i64: 1, 4, 8, 8>}]} {
    %c0 = arith.constant 0 : index
    %c0_0 = arith.constant 0 : index
    %c0_1 = arith.constant 0 : index
    %0 = vector.load %arg3[%c0, %c0_0, %c0_1] : memref<1x4x8xf32, #tpu.memory_space<vmem>>, vector<1x4x8xf32>
    %1 = vector.shape_cast %0 : vector<1x4x8xf32> to vector<4x8xf32>
    %c0_2 = arith.constant 0 : index
    %c0_3 = arith.constant 0 : index
    %c0_4 = arith.constant 0 : index
    %2 = vector.load %arg4[%c0_2, %c0_3, %c0_4] : memref<1x4x8xf32, #tpu.memory_space<vmem>>, vector<1x4x8xf32>
    %3 = vector.shape_cast %2 : vector<1x4x8xf32> to vector<4x8xf32>
    %4 = vector.shape_cast %1 : vector<4x8xf32> to vector<4x8x1xf32>
    %5 = vector.shape_cast %3 : vector<4x8xf32> to vector<4x1x8xf32>
    %6 = vector.broadcast %4 : vector<4x8x1xf32> to vector<4x8x8xf32>
    %7 = vector.broadcast %5 : vector<4x1x8xf32> to vector<4x8x8xf32>
    %8 = arith.addf %6, %7 : vector<4x8x8xf32>
    %c0_5 = arith.constant 0 : index
    %c0_6 = arith.constant 0 : index
    %c0_7 = arith.constant 0 : index
    %c0_8 = arith.constant 0 : index
    %9 = vector.load %arg5[%c0_5, %c0_6, %c0_7, %c0_8] : memref<1x4x8x8xf32, #tpu.memory_space<vmem>>, vector<1x4x8x8xf32>
    %10 = vector.shape_cast %9 : vector<1x4x8x8xf32> to vector<4x8x8xf32>
    %11 = vector.shape_cast %8 : vector<4x8x8xf32> to vector<1x4x8x8xf32>
    tpu.vector_store %arg5[%c0_5, %c0_6, %c0_7, %c0_8], %11 {strides = array<i32>} : memref<1x4x8x8xf32, #tpu.memory_space<vmem>>, vector<1x4x8x8xf32>,
    return
  }
  func.func @transform_0(%arg0: i32, %arg1: i32, %arg2: i32) -> (i32, i32, i32) {
    %c0_i32 = arith.constant 0 : i32
    %c0_i32_0 = arith.constant 0 : i32
    return %arg0, %c0_i32, %arg1 : i32, i32, i32
  }
  func.func @transform_1(%arg0: i32, %arg1: i32, %arg2: i32) -> (i32, i32, i32) {
    %c0_i32 = arith.constant 0 : i32
    %c0_i32_0 = arith.constant 0 : i32
    return %arg0, %c0_i32, %arg2 : i32, i32, i32
  }
  func.func @transform_2(%arg0: i32, %arg1: i32, %arg2: i32) -> (i32, i32, i32, i32) {
    %c0_i32 = arith.constant 0 : i32
    %c0_i32_0 = arith.constant 0 : i32
    return %arg0, %c0_i32, %arg1, %arg2 : i32, i32, i32, i32
  }
}

</mosaic_0001>

<llo_original>
// kernel: tpu_custom_call.1
$region0: #{tpu_custom_call.1}
  #allocation0 [shape = 'u32[]', space=smem, size = 0x4, offset = 0x4, fixed_abs, tag = 'smem constant byte address 0x4 - core index']
  #allocation1 [shape = 'u32[144,128]{1,0:T(1,128)}', space=vmem, size = 0x12000, scoped, tag = 'internal scratch']
  %s0 = inlined_call_operand.hbm [shape: f32[2,4,8], index: 0, kind: input, shape index: {}]
  %s1 = inlined_call_operand.hbm [shape: f32[2,4,8], index: 1, kind: input, shape index: {}]
  %s2 = inlined_call_operand.hbm [shape: f32[2,4,8,8], index: 2, kind: output, shape index: {}]
  %s3 = sld [smem:[#allocation0]]
  $region49: #{tpu_custom_call.1} parent=0
    _
  %s5 = ssub.s32 1, %s3
  %s6 = scalar_select 0, %s5, %s3
  $region1: #{tpu_custom_call.1} parent=0
    #allocation2 [shape = 'u8[4096]{0}', space=vmem, size = 0x1000, scoped, tag = 'input window, operand 0']
    #allocation3 [shape = 's32[2]{0}', space=sflag, size = 0x8, scoped, tag = 'scoped memory for tpu_custom_call.1']
    #allocation4 [shape = 's32[2]{0}', space=sflag, size = 0x8, scoped, tag = 'scoped memory for tpu_custom_call.1']
    #allocation5 [shape = 'u8[4096]{0}', space=vmem, size = 0x1000, scoped, tag = 'input window, operand 1']
    #allocation6 [shape = 's32[2]{0}', space=sflag, size = 0x8, scoped, tag = 'scoped memory for tpu_custom_call.1']
    #allocation7 [shape = 'u8[32768]{0}', space=vmem, size = 0x8000, scoped, tag = 'output window, operand 0']
    %7 = vsyncpa [#allocation3], 0
    %s8 = scalar_lea.sflag [#allocation3], 1
    %9 = vsyncpa %s8, 0
    %10 = vsyncpa [#allocation6], 0
    %s11 = scalar_lea.sflag [#allocation6], 1
    %12 = vsyncpa %s11, 0
    %13 = vsyncpa [#allocation4], 0
    %s14 = scalar_lea.sflag [#allocation4], 1
    %15 = vsyncpa %s14, 0
    loop: start=0, step=1, limit=4
    $region2: #{tpu_custom_call.1} parent=1 // loop_pre_header
      _
    $region3: #{tpu_custom_call.1} parent=1 // loop_header
      %s17 = sphi 0, %s21
      %p18 = scmp.ge.s32.totalorder %s17, 4
      %s24 = sphi 0, %s43
      %s25 = sphi 0, %s39
      %s26 = sphi 0, %s35
      %s27 = sphi 0, %s24
      %s28 = sphi 0, %s25
      %s29 = sphi 0, %s26
      %s30 = sphi 0, %s27
      %s31 = sphi 0, %s28
      %s32 = sphi 0, %s29
      %s48 = sphi 0, %s50
      %s51 = sphi 0, %s48
      %s52 = sphi 0, %s51
      %s68 = sphi 0, %s52
      %s76 = sphi 0, %s78
      %s79 = sphi 0, %s76
      %s80 = sphi 0, %s79
      %s96 = sphi 0, %s80
      %s106 = sphi 0, %s108
      %s109 = sphi 0, %s106
      %s110 = sphi 0, %s109
      %s126 = sphi 0, %s110
    $region4: #{tpu_custom_call.1} parent=1 // loop_header_branch
      %20 = sbr.rel (%p18) target = $region8
    $region5: #{tpu_custom_call.1} parent=1 // loop_body
      %s22 = ssub.s32 %s17, 1
      %s23 = ssub.s32 %s17, 2
      %s33 = sadd.s32 1, %s26
      %p34 = scmp.ge.s32.totalorder %s33, 1
      %s35 = scalar_select %p34, 0, %s33
      %s36 = sadd.s32 1, %s25
      %s37 = scalar_select %p34, %s36, %s25
      %p38 = scmp.ge.s32.totalorder %s37, 1
      %s39 = scalar_select %p38, 0, %s37
      %s40 = sadd.s32 1, %s24
      %s41 = scalar_select %p38, %s40, %s24
      %p42 = scmp.ge.s32.totalorder %s41, 2
      %s43 = scalar_select %p42, 0, %s41
      %s44 = ssub.s32 %s24, %s43
      %s45 = ssub.s32 %s25, %s39
      %s46 = sor.u32 %s44, %s45
      %p47 = scmp.eq.s32.totalorder %s46, 0
      %s49 = sadd.s32 %s48, 1
      %s50 = scalar_select %p47, %s48, %s49
      %p53 = pneg %p47
      %p54 = scmp.eq.s32.totalorder %s17, 1
      %p55 = por %p53, %p54
      %p56 = scmp.ne.s32.totalorder %s48, %s51
      %p57 = scmp.eq.s32.totalorder %s17, 0
      %p58 = por %p56, %p57
      %p59 = scmp.ne.s32.totalorder %s48, %s51
      %p60 = scmp.eq.s32.totalorder %s22, 1
      %p61 = por %p59, %p60
      %p62 = scmp.ne.s32.totalorder %s51, %s52
      %p63 = scmp.eq.s32.totalorder %s22, 0
      %p64 = por %p62, %p63
      %p65 = scmp.ne.s32.totalorder %s51, %s52
      %p66 = scmp.eq.s32.totalorder %s23, 1
      %p67 = por %p65, %p66
      %p69 = scmp.ne.s32.totalorder %s52, %s68
      %p70 = scmp.eq.s32.totalorder %s23, 0
      %p71 = por %p69, %p70
      %s72 = ssub.s32 %s24, %s43
      %s73 = ssub.s32 %s26, %s35
      %s74 = sor.u32 %s72, %s73
      %p75 = scmp.eq.s32.totalorder %s74, 0
      %s77 = sadd.s32 %s76, 1
      %s78 = scalar_select %p75, %s76, %s77
      %p81 = pneg %p75
      %p82 = scmp.eq.s32.totalorder %s17, 1
      %p83 = por %p81, %p82
      %p84 = scmp.ne.s32.totalorder %s76, %s79
      %p85 = scmp.eq.s32.totalorder %s17, 0
      %p86 = por %p84, %p85
      %p87 = scmp.ne.s32.totalorder %s76, %s79
      %p88 = scmp.eq.s32.totalorder %s22, 1
      %p89 = por %p87, %p88
      %p90 = scmp.ne.s32.totalorder %s79, %s80
      %p91 = scmp.eq.s32.totalorder %s22, 0
      %p92 = por %p90, %p91
      %p93 = scmp.ne.s32.totalorder %s79, %s80
      %p94 = scmp.eq.s32.totalorder %s23, 1
      %p95 = por %p93, %p94
      %p97 = scmp.ne.s32.totalorder %s80, %s96
      %p98 = scmp.eq.s32.totalorder %s23, 0
      %p99 = por %p97, %p98
      %s100 = ssub.s32 %s24, %s43
      %s101 = ssub.s32 %s25, %s39
      %s102 = sor.u32 %s100, %s101
      %s103 = ssub.s32 %s26, %s35
      %s104 = sor.u32 %s102, %s103
      %p105 = scmp.eq.s32.totalorder %s104, 0
      %s107 = sadd.s32 %s106, 1
      %s108 = scalar_select %p105, %s106, %s107
      %p111 = pneg %p105
      %p112 = scmp.eq.s32.totalorder %s17, 1
      %p113 = por %p111, %p112
      %p114 = scmp.ne.s32.totalorder %s106, %s109
      %p115 = scmp.eq.s32.totalorder %s17, 0
      %p116 = por %p114, %p115
      %p117 = scmp.ne.s32.totalorder %s106, %s109
      %p118 = scmp.eq.s32.totalorder %s22, 1
      %p119 = por %p117, %p118
      %p120 = scmp.ne.s32.totalorder %s109, %s110
      %p121 = scmp.eq.s32.totalorder %s22, 0
      %p122 = por %p120, %p121
      %p123 = scmp.ne.s32.totalorder %s109, %s110
      %p124 = scmp.eq.s32.totalorder %s23, 1
      %p125 = por %p123, %p124
      %p127 = scmp.ne.s32.totalorder %s110, %s126
      %p128 = scmp.eq.s32.totalorder %s23, 0
      %p129 = por %p127, %p128
      %p130 = scmp.le.s32.totalorder 1, %s17
      %p131 = scmp.lt.s32.totalorder %s17, 3
      %p132 = pnand %p130, %p131
      %p133 = pneg %p132
      // Predicated region
      $region9: #{tpu_custom_call.1} parent=5 // pred_check
        _
      $region10: #{tpu_custom_call.1} parent=5 // pred_check_branch
        %135 = sbr.rel (%p132) target = $region12
      $region11: #{tpu_custom_call.1} parent=5 // pred_region
        %s136 = ssub.s32 %s17, 1
      $region12: #{tpu_custom_call.1} parent=5 // pred_fallthru
        _
      %p137 = scmp.lt.s32.totalorder %s17, 2
      // Predicated region
      $region13: #{tpu_custom_call.1} parent=5 // pred_check
        %p138 = pneg %p137
      $region14: #{tpu_custom_call.1} parent=5 // pred_check_branch
        %140 = sbr.rel (%p138) target = $region16
      $region15: #{tpu_custom_call.1} parent=5 // pred_region
        // Predicated region
        $region17: #{tpu_custom_call.1} parent=15 // pred_check
          %p141 = pneg %p58
        $region18: #{tpu_custom_call.1} parent=15 // pred_check_branch
          %143 = sbr.rel (%p141) target = $region20
        $region19: #{tpu_custom_call.1} parent=15 // pred_region
          %s144 = sand.u32 %s48, 1
          %s145 = scalar_lea.sflag [#allocation3], %s144
          %s146 = sand.u32 %s48, 1
          %s147 = smul.addr %s146, 4
          %s148 = scalar_lea.vmem [#allocation2], %s147
          %s150 = ssub.s32 64, 64
          %151 = vsyncadd %s145, %s150
          %s152 = sadd.s32 %s25, %s24
          %s153 = smul.addr %s152, 64
          %s154 = scalar_lea.hbm %s0, %s153
          %s156 = sshll.u32 %s148, 4
          %s157 = int_to_ptr.vmem [resolvable:$true] %s156
          %159 = dma.hbm_to_vmem [thread:$0]  %s154, 64, %s157, %s145
        $region20: #{tpu_custom_call.1} parent=15 // pred_fallthru
          _
        // Predicated region
        $region21: #{tpu_custom_call.1} parent=15 // pred_check
          %p160 = pneg %p86
        $region22: #{tpu_custom_call.1} parent=15 // pred_check_branch
          %162 = sbr.rel (%p160) target = $region24
        $region23: #{tpu_custom_call.1} parent=15 // pred_region
          %s163 = sand.u32 %s76, 1
          %s164 = scalar_lea.sflag [#allocation6], %s163
          %s165 = sand.u32 %s76, 1
          %s166 = smul.addr %s165, 4
          %s167 = scalar_lea.vmem [#allocation5], %s166
          %s169 = ssub.s32 64, 64
          %170 = vsyncadd %s164, %s169
          %s171 = sadd.s32 %s26, %s24
          %s172 = smul.addr %s171, 64
          %s173 = scalar_lea.hbm %s1, %s172
          %s175 = sshll.u32 %s167, 4
          %s176 = int_to_ptr.vmem [resolvable:$true] %s175
          %178 = dma.hbm_to_vmem [thread:$0]  %s173, 64, %s176, %s164
        $region24: #{tpu_custom_call.1} parent=15 // pred_fallthru
          _
      $region16: #{tpu_custom_call.1} parent=5 // pred_fallthru
        _
      %p179 = scmp.le.s32.totalorder 1, %s17
      %p180 = scmp.lt.s32.totalorder %s17, 3
      %p181 = pnand %p179, %p180
      %p182 = pneg %p181
      // Predicated region
      $region25: #{tpu_custom_call.1} parent=5 // pred_check
        _
      $region26: #{tpu_custom_call.1} parent=5 // pred_check_branch
        %184 = sbr.rel (%p181) target = $region28
      $region27: #{tpu_custom_call.1} parent=5 // pred_region
        %s185 = ssub.s32 %s17, 1
        %s186 = sand.u32 %s51, 1
        %s187 = scalar_lea.sflag [#allocation3], %s186
        %s188 = sand.u32 %s51, 1
        %s189 = smul.addr %s188, 4
        %s190 = scalar_lea.vmem [#allocation2], %s189
        // Predicated region
        $region29: #{tpu_custom_call.1} parent=27 // pred_check
          %p191 = pneg %p64
        $region30: #{tpu_custom_call.1} parent=27 // pred_check_branch
          %193 = sbr.rel (%p191) target = $region32
        $region31: #{tpu_custom_call.1} parent=27 // pred_region
          %194 = dma.done %s187, 64
        $region32: #{tpu_custom_call.1} parent=27 // pred_fallthru
          _
        %s195 = sand.u32 %s79, 1
        %s196 = scalar_lea.sflag [#allocation6], %s195
        %s197 = sand.u32 %s79, 1
        %s198 = smul.addr %s197, 4
        %s199 = scalar_lea.vmem [#allocation5], %s198
        // Predicated region
        $region33: #{tpu_custom_call.1} parent=27 // pred_check
          %p200 = pneg %p92
        $region34: #{tpu_custom_call.1} parent=27 // pred_check_branch
          %202 = sbr.rel (%p200) target = $region36
        $region35: #{tpu_custom_call.1} parent=27 // pred_region
          %203 = dma.done %s196, 64
        $region36: #{tpu_custom_call.1} parent=27 // pred_fallthru
          _
        %s204 = sand.u32 %s51, 1
        %s205 = scalar_lea.sflag [#allocation3], %s204
        %s206 = sand.u32 %s51, 1
        %s207 = smul.addr %s206, 4
        %s208 = scalar_lea.vmem [#allocation2], %s207
        %p209 = pneg %p64
        %p210 = pneg %p61
        %s211 = sand.u32 %s79, 1
        %s212 = scalar_lea.sflag [#allocation6], %s211
        %s213 = sand.u32 %s79, 1
        %s214 = smul.addr %s213, 4
        %s215 = scalar_lea.vmem [#allocation5], %s214
        %p216 = pneg %p92
        %p217 = pneg %p89
        %p218 = pneg %p122
        %p219 = pneg %p119
        %s220 = sand.u32 %s109, 1
        %s221 = scalar_lea.sflag [#allocation4], %s220
        %s222 = sand.u32 %s109, 1
        %s223 = smul.addr %s222, 32
        %s224 = scalar_lea.vmem [#allocation7], %s223
        %v225 = vld [vmem:[%s190] sm:$0xf]
        %v226 = vld [vmem:[%s199] sm:$0xf]
        %v227 = vlaneseq
        %v228 = vshrl.u32 %v227, 7
        %v229 = vsub.s32 0, %v228
        %v230 = vrot.slane %v225, %v229
        %232 = vbcast.lane.b32.xlu0 %v230, 256
        %v233 = vpop.permute.xlu0 %232
        %v234 = vlaneseq
        %v235 = vshrl.u32 %v234, 7
        %v236 = vsub.s32 1, %v235
        %v237 = vrot.slane %v225, %v236
        %239 = vbcast.lane.b32.xlu0 %v237, 256
        %v240 = vpop.permute.xlu0 %239
        %v241 = vlaneseq
        %v242 = vshrl.u32 %v241, 7
        %v243 = vsub.s32 2, %v242
        %v244 = vrot.slane %v225, %v243
        %246 = vbcast.lane.b32.xlu0 %v244, 256
        %v247 = vpop.permute.xlu0 %246
        %v248 = vlaneseq
        %v249 = vshrl.u32 %v248, 7
        %v250 = vsub.s32 3, %v249
        %v251 = vrot.slane %v225, %v250
        %253 = vbcast.lane.b32.xlu0 %v251, 256
        %v254 = vpop.permute.xlu0 %253
        %v257 = vunpack.c.l.s4 1966171168
        %v258 = vunpack.c.0.s8 %v257
        %v259 = vlaneseq
        %v260 = vshrl.u32 %v259, 7
        %v261 = vsub.s32 %v258, %v260
        %v262 = vrot.slane %v226, %v261
        %v263 = vcombine.high %v262, %v262
        %v265 = vunpack.c.l.s4 1966171168
        %v266 = vunpack.c.0.s8 %v265
        %v267 = vlaneseq
        %v268 = vshrl.u32 %v267, 7
        %v269 = vsub.s32 %v266, %v268
        %v270 = vrot.slane %v262, %v269
        %v272 = vunpack.c.l.s4 1966171168
        %v273 = vunpack.c.0.s8 %v272
        %v274 = vlaneseq
        %v275 = vshrl.u32 %v274, 7
        %v276 = vsub.s32 %v273, %v275
        %v277 = vrot.slane %v263, %v276
        %v278 = vcombine.high %v270, %v270
        %v279 = vcombine.high %v277, %v277
        %v280 = vlaneseq
        %v281 = vshrl.u32 %v280, 7
        %v282 = vsub.s32 0, %v281
        %v283 = vrot.slane %v270, %v282
        %v284 = vlaneseq
        %v285 = vshrl.u32 %v284, 7
        %v286 = vsub.s32 0, %v285
        %v287 = vrot.slane %v277, %v286
        %v288 = vlaneseq
        %v289 = vshrl.u32 %v288, 7
        %v290 = vsub.s32 0, %v289
        %v291 = vrot.slane %v278, %v290
        %v292 = vlaneseq
        %v293 = vshrl.u32 %v292, 7
        %v294 = vsub.s32 0, %v293
        %v295 = vrot.slane %v279, %v294
        %v300 = vadd.f32 %v233, %v283
        %v301 = vadd.f32 %v240, %v287
        %v302 = vadd.f32 %v247, %v291
        %v303 = vadd.f32 %v254, %v295
        %vm304 = vcmask 64512
        %305 = vst.msk [vmem:[%s224] sm:$0xff] %vm304, %v300
        %306 = vst.msk [vmem:[%s224 + $0x8] sm:$0xff] %vm304, %v301
        %307 = vst.msk [vmem:[%s224 + $0x10] sm:$0xff] %vm304, %v302
        %308 = vst.msk [vmem:[%s224 + $0x18] sm:$0xff] %vm304, %v303
        %s309 = sand.u32 %s109, 1
        %s310 = scalar_lea.sflag [#allocation4], %s309
        %s311 = sand.u32 %s109, 1
        %s312 = smul.addr %s311, 32
        %s313 = scalar_lea.vmem [#allocation7], %s312
        // Predicated region
        $region37: #{tpu_custom_call.1} parent=27 // pred_check
          %p314 = pneg %p119
        $region38: #{tpu_custom_call.1} parent=27 // pred_check_branch
          %316 = sbr.rel (%p314) target = $region40
        $region39: #{tpu_custom_call.1} parent=27 // pred_region
          %s318 = ssub.s32 512, 512
          %319 = vsyncadd %s310, %s318
          %s320 = sadd.s32 %s29, %s28
          %s321 = smul.addr %s27, 4
          %s322 = sadd.s32 %s320, %s321
          %s323 = smul.addr %s322, 128
          %s324 = scalar_lea.hbm %s2, %s323
          %s325 = sshll.u32 %s313, 4
          %s326 = int_to_ptr.vmem [resolvable:$true] %s325
          %331 = dma.vmem_to_hbm [thread:$0]  %s326, 512, %s324, %s310, 128, 128, 8
        $region40: #{tpu_custom_call.1} parent=27 // pred_fallthru
          _
      $region28: #{tpu_custom_call.1} parent=5 // pred_fallthru
        _
      %p332 = scmp.le.s32.totalorder 2, %s17
      // Predicated region
      $region41: #{tpu_custom_call.1} parent=5 // pred_check
        %p333 = pneg %p332
      $region42: #{tpu_custom_call.1} parent=5 // pred_check_branch
        %335 = sbr.rel (%p333) target = $region44
      $region43: #{tpu_custom_call.1} parent=5 // pred_region
        %s336 = ssub.s32 %s17, 2
        // Predicated region
        $region45: #{tpu_custom_call.1} parent=43 // pred_check
          %p337 = pneg %p125
        $region46: #{tpu_custom_call.1} parent=43 // pred_check_branch
          %339 = sbr.rel (%p337) target = $region48
        $region47: #{tpu_custom_call.1} parent=43 // pred_region
          %s340 = sand.u32 %s110, 1
          %s341 = scalar_lea.sflag [#allocation4], %s340
          %s342 = sand.u32 %s110, 1
          %s343 = smul.addr %s342, 32
          %s344 = scalar_lea.vmem [#allocation7], %s343
          %345 = dma.done %s341, 512
        $region48: #{tpu_custom_call.1} parent=43 // pred_fallthru
          _
      $region44: #{tpu_custom_call.1} parent=5 // pred_fallthru
        _
    $region6: #{tpu_custom_call.1} parent=1 // loop_footer
      %s21 = sadd.s32 1, %s17
    $region7: #{tpu_custom_call.1} parent=1 // loop_footer_branch
      %16 = sbr.rel target = $region3
    $region8: #{tpu_custom_call.1} parent=1 // loop_exit
      _
    %346 = vsyncpa [#allocation3], 1
    %s347 = scalar_lea.sflag [#allocation3], 1
    %348 = vsyncpa %s347, 1
    %349 = vsyncpa [#allocation6], 1
    %s350 = scalar_lea.sflag [#allocation6], 1
    %351 = vsyncpa %s350, 1
    %352 = vsyncpa [#allocation4], 1
    %s353 = scalar_lea.sflag [#allocation4], 1
    %354 = vsyncpa %s353, 1

</llo_original>
